<compile_context>
chip_gen: v5e
topology: v5e:2x2
jax: 0.10.0
libtpu: 0.0.40
codegen_flags: <defaults>
</compile_context>

<pallas_src>
import jax
import jax.numpy as jnp
from jax.experimental import pallas as pl
from jax.experimental.pallas import tpu as pltpu

_LANES = 128
# Per-block lane width cap: 32768 cols * 8 sublanes * 4 B = 1 MiB f32 block.
_MAX_BLOCK_COLS = 32768


def _sublanes_for(dtype) -> int:
    """Native packed sublane tile height: 8 (f32), 16 (bf16), 32 (int8/fp8)."""
    return 32 // jnp.dtype(dtype).itemsize


def _block_sum_kernel(x_ref, o_ref):
    """Read-only touch: accumulate the block sum into a (1, 1) f32 output."""
    @pl.when(pl.program_id(0) == 0)
    def _():
        o_ref[...] = jnp.zeros_like(o_ref)

    o_ref[...] += jnp.sum(x_ref[...].astype(jnp.float32), keepdims=True)


@jax.jit
def feat_sum(feat):
    """Sum all elements of `feat` via a gridded, read-only Pallas reduction."""
    sub = _sublanes_for(feat.dtype)
    flat = feat.reshape(-1)
    total = flat.shape[0]

    # Pad (with zeros; sum-neutral) so the slab is (sub, cols) with cols a
    # multiple of 128 and of the chosen block width.  Shapes are static under
    # jit, so this is all trace-time Python arithmetic.
    vreg = sub * _LANES
    padded = ((total + vreg - 1) // vreg) * vreg
    cols = padded // sub
    block_cols = min(cols, _MAX_BLOCK_COLS)
    cols = ((cols + block_cols - 1) // block_cols) * block_cols
    padded = cols * sub

    if padded != total:
        flat = jnp.pad(flat, (0, padded - total))
    slab = flat.reshape(sub, cols)

    grid = cols // block_cols
    out = pl.pallas_call(
        _block_sum_kernel,
        out_shape=jax.ShapeDtypeStruct((1, 1), jnp.float32),
        grid=(grid,),
        in_specs=[pl.BlockSpec((sub, block_cols), lambda i: (0, i))],
        out_specs=pl.BlockSpec((1, 1), lambda i: (0, 0)),
        compiler_params=pltpu.CompilerParams(
            dimension_semantics=("arbitrary",)),
    )(slab)
    return out[0, 0]


class ContrastiveLoss:
    """JAX port of the (no-op) PyTorch ContrastiveLoss module."""

    def __init__(self, margin):
        # The reference __init__ ignores `margin` and registers no parameters.
        pass

    def forward(self, t_feat_list, s_feat_list, t_cond_list, s_cond_list):
        # Faithful to the reference: unpack every stage, do no arithmetic,
        # launch no device work, return None.
        for i in range(len(t_feat_list)):
            t_feat = t_feat_list[i]   # noqa: F841  (unpacked but unused, as in reference)
            s_feat = s_feat_list[i]   # noqa: F841
            t_cond = t_cond_list[i]   # noqa: F841
            s_cond = s_cond_list[i]   # noqa: F841
        return None

    __call__ = forward


if __name__ == "__main__":
    key = jax.random.PRNGKey(0)
    k1, k2, k3, k4 = jax.random.split(key, 4)

    # Two "stages" of feature maps (NCHW) plus per-sample condition labels.
    t_feat_list = [
        jax.random.normal(k1, (2, 4, 16, 16), dtype=jnp.float32),
        jax.random.normal(k2, (2, 8, 8, 8), dtype=jnp.float32),
    ]
    s_feat_list = [
        jax.random.normal(k3, (2, 4, 16, 16), dtype=jnp.float32),
        jax.random.normal(k4, (2, 8, 8, 8), dtype=jnp.float32),
    ]
    t_cond_list = [jnp.array([0, 1], dtype=jnp.int32),
                   jnp.array([1, 0], dtype=jnp.int32)]
    s_cond_list = [jnp.array([0, 1], dtype=jnp.int32),
                   jnp.array([1, 1], dtype=jnp.int32)]

    # Module forward: zero device work, returns None (matches PyTorch exactly).
    loss_mod = ContrastiveLoss(margin=1.0)
    result = loss_mod(t_feat_list, s_feat_list, t_cond_list, s_cond_list)
    assert result is None

    # Exercise the standalone read-only Pallas reduction kernel once.
    got = jax.block_until_ready(feat_sum(t_feat_list[0]))
    ref = jnp.sum(t_feat_list[0].astype(jnp.float32))
    assert jnp.allclose(got, ref, rtol=1e-5, atol=1e-5), (got, ref)

    print("KERNEL_OK")
</pallas_src>

<mosaic_0001>
module attributes {stable_mosaic.version = 11 : i64} {
  func.func @_block_sum_kernel(%arg0: i32, %arg1: memref<8x256xf32, #tpu.memory_space<vmem>>, %arg2: memref<1x1xf32, #tpu.memory_space<vmem>>) attributes {dimension_semantics = [#tpu.dimension_semantics<arbitrary>], iteration_bounds = array<i64: 1>, scalar_prefetch = 0 : i64, scratch_operands = 0 : i64, tpu.core_type = #tpu.core_type<tc>, window_params = [{transform_indices = @transform_0, window_bounds = array<i64: 8, 256>}, {pipeline_mode = #tpu.pipeline_mode<synchronous>, transform_indices = @transform_1, window_bounds = array<i64: 1, 1>}]} {
    %c0_i32 = arith.constant 0 : i32
    %0 = arith.cmpi eq, %arg0, %c0_i32 : i32
    %1 = arith.extui %0 : i1 to i32
    %c0_i32_0 = arith.constant 0 : i32
    %2 = arith.cmpi ne, %1, %c0_i32_0 : i32
    scf.if %2 {
      %cst_6 = arith.constant 0.000000e+00 : f32
      %12 = vector.broadcast %cst_6 : f32 to vector<1x1xf32>
      %c0_7 = arith.constant 0 : index
      %c0_8 = arith.constant 0 : index
      %13 = vector.load %arg2[%c0_7, %c0_8] : memref<1x1xf32, #tpu.memory_space<vmem>>, vector<1x1xf32>
      tpu.vector_store %arg2[%c0_7, %c0_8], %12 {strides = array<i32>} : memref<1x1xf32, #tpu.memory_space<vmem>>, vector<1x1xf32>,
    } else {
    }
    %c0 = arith.constant 0 : index
    %c0_1 = arith.constant 0 : index
    %3 = vector.load %arg2[%c0, %c0_1] : memref<1x1xf32, #tpu.memory_space<vmem>>, vector<1x1xf32>
    %c0_2 = arith.constant 0 : index
    %c0_3 = arith.constant 0 : index
    %4 = vector.load %arg1[%c0_2, %c0_3] : memref<8x256xf32, #tpu.memory_space<vmem>>, vector<8x256xf32>
    %5 = vector.shape_cast %4 : vector<8x256xf32> to vector<1x8x256xf32>
    %cst = arith.constant dense<0.000000e+00> : vector<1xf32>
    %6 = vector.multi_reduction <add>, %5, %cst [1, 2] : vector<1x8x256xf32> to vector<1xf32>
    %7 = vector.shape_cast %6 : vector<1xf32> to vector<1x1x1xf32>
    %8 = vector.extract %7[0, 0, 0] : f32 from vector<1x1x1xf32>
    %9 = vector.broadcast %8 : f32 to vector<1x1xf32>
    %10 = arith.addf %3, %9 : vector<1x1xf32>
    %c0_4 = arith.constant 0 : index
    %c0_5 = arith.constant 0 : index
    %11 = vector.load %arg2[%c0_4, %c0_5] : memref<1x1xf32, #tpu.memory_space<vmem>>, vector<1x1xf32>
    tpu.vector_store %arg2[%c0_4, %c0_5], %10 {strides = array<i32>} : memref<1x1xf32, #tpu.memory_space<vmem>>, vector<1x1xf32>,
    return
  }
  func.func @transform_0(%arg0: i32) -> (i32, i32) {
    %c0_i32 = arith.constant 0 : i32
    %c0_i32_0 = arith.constant 0 : i32
    return %c0_i32, %arg0 : i32, i32
  }
  func.func @transform_1(%arg0: i32) -> (i32, i32) {
    %c0_i32 = arith.constant 0 : i32
    %c0_i32_0 = arith.constant 0 : i32
    %c0_i32_1 = arith.constant 0 : i32
    return %c0_i32, %c0_i32_0 : i32, i32
  }
}

</mosaic_0001>

<llo_original>
// kernel: feat_sum.1
$region0: #{feat_sum.1}
  #allocation0 [shape = 'u32[]', space=smem, size = 0x4, offset = 0x4, fixed_abs, tag = 'smem constant byte address 0x4 - core index']
  #allocation1 [shape = 'u32[72,128]{1,0:T(1,128)}', space=vmem, size = 0x9000, scoped, tag = 'internal scratch']
  %s0 = inlined_call_operand.vmem [shape: f32[8,256], index: 0, kind: input, shape index: {}]
  %s1 = inlined_call_operand.hbm [shape: f32[1,1], index: 1, kind: output, shape index: {}]
  %s2 = sld [smem:[#allocation0]]
  $region18: #{feat_sum.1} parent=0
    _
  %s4 = ssub.s32 1, %s2
  %s5 = scalar_select 0, %s4, %s2
  $region1: #{feat_sum.1} parent=0
    #allocation2 [shape = 'u8[512]{0}', space=vmem, size = 0x400, scoped, tag = 'output window, operand 0, single buffered']
    #allocation3 [shape = 's32[1]{0}', space=sflag, size = 0x4, scoped, tag = 'scoped memory for feat_sum.1']
    %6 = vsyncpa [#allocation3], 0
    // Predicated region
    $region2: #{feat_sum.1} parent=1 // pred_check
      _
    $region3: #{feat_sum.1} parent=1 // pred_check_branch
      %8 = sbr.rel (0) target = $region5
    $region4: #{feat_sum.1} parent=1 // pred_region
      _
    $region5: #{feat_sum.1} parent=1 // pred_fallthru
      _
    %p9 = scmp.eq.s32.totalorder 0, 0
    // Predicated region
    $region6: #{feat_sum.1} parent=1 // pred_check
      %p10 = pneg %p9
    $region7: #{feat_sum.1} parent=1 // pred_check_branch
      %12 = sbr.rel (%p10) target = $region9
    $region8: #{feat_sum.1} parent=1 // pred_region
      %vm13 = vcmask 0
      %14 = vst.msk [vmem:[#allocation2] sm:$0x1] %vm13, 0.0
    $region9: #{feat_sum.1} parent=1 // pred_fallthru
      _
    %v15 = vld [vmem:[#allocation2] sm:$0x1]
    %v16 = vld [vmem:[%s0] sm:$0xff]
    %v17 = vld [vmem:[%s0 + $0x8] sm:$0xff]
    %v18 = vadd.f32 %v16, %v17
    %19 = vadd.xlane.f32.xlu0 %v18
    %v20 = vpop.xlane.xlu0 %19
    %v21 = vrot.slane %v20, 4
    %v22 = vadd.f32 %v20, %v21
    %v23 = vrot.slane %v22, 2
    %v24 = vadd.f32 %v22, %v23
    %v25 = vrot.slane %v24, 1
    %v26 = vadd.f32 %v24, %v25
    %s27 = vtos %v26
    %v28 = vstv %s27
    %v29 = vadd.f32 %v15, %v28
    %vm30 = vcmask 0
    %31 = vst.msk [vmem:[#allocation2] sm:$0x1] %vm30, %v29
    // Predicated region
    $region10: #{feat_sum.1} parent=1 // pred_check
      _
    $region11: #{feat_sum.1} parent=1 // pred_check_branch
      %33 = sbr.rel (0) target = $region13
    $region12: #{feat_sum.1} parent=1 // pred_region
      %35 = vsyncadd [#allocation3], 0
      %s37 = sshll.u32 [#allocation2], 4
      %s38 = int_to_ptr.vmem [resolvable:$true] %s37
      %s39 = sshll.u32 %s1, 4
      %s40 = int_to_ptr.hbm [resolvable:$true] %s39
      %42 = dma.vmem_to_hbm [thread:$0]  %s38, 16, %s40, [#allocation3]
    $region13: #{feat_sum.1} parent=1 // pred_fallthru
      _
    // Predicated region
    $region14: #{feat_sum.1} parent=1 // pred_check
      _
    $region15: #{feat_sum.1} parent=1 // pred_check_branch
      %44 = sbr.rel (0) target = $region17
    $region16: #{feat_sum.1} parent=1 // pred_region
      %46 = dma.done [#allocation3], 16
    $region17: #{feat_sum.1} parent=1 // pred_fallthru
      _
    %47 = vsyncpa [#allocation3], 1

</llo_original>
